<compile_context>
chip_gen: v5e
topology: v5e:2x2
jax: 0.10.0
libtpu: 0.0.40
codegen_flags: <defaults>
</compile_context>

<pallas_src>
import jax
import jax.numpy as jnp
from jax.experimental import pallas as pl
from jax.experimental.pallas import tpu as pltpu


def _nmf_matmul_kernel(l_ref, f_ref, o_ref):
    # l_ref: (tb, k)  pre-normalized document-topic rows (softmaxed over k)
    # f_ref: (k, tm)  pre-normalized topic-term tile     (softmaxed over vocab)
    # o_ref: (tb, tm) output tile
    o_ref[...] = jnp.dot(l_ref[...], f_ref[...],
                         preferred_element_type=jnp.float32)


def _round_up(x, mult):
    return -(-x // mult) * mult


def _physical_vmem_bytes():
    """Per-core VMEM capacity; conservative 64 MiB (v7x) fallback."""
    try:
        cap = getattr(pltpu.get_tpu_info(), "vmem_capacity_bytes", None)
        if cap:
            return int(cap)
    except Exception:
        pass
    return 64 << 20


def _double_buffer_bytes(tb, tm, k):
    # Pallas double-buffers each input tile and the output tile (all f32).
    return 2 * 4 * (tb * k + k * tm + tb * tm)


def _pick_tiles(B, m, k, budget, tb_cap=1024, tm_cap=8192):
    """Pick (tb, tm): tb multiple of 8, tm multiple of 128, with the
    double-buffered working set within `budget`. Small problems get a
    single-block fast path (grid=(1,1))."""
    b_pad = _round_up(B, 8)
    m_pad = _round_up(m, 128)
    # Fast path: whole problem as one block (no per-step pipeline overhead).
    if _double_buffer_bytes(b_pad, m_pad, k) <= budget:
        return b_pad, m_pad
    tb = min(b_pad, tb_cap)
    tm = min(m_pad, tm_cap)
    # Shrink the larger tile until the double-buffered working set fits.
    while _double_buffer_bytes(tb, tm, k) > budget:
        if tm >= tb and tm > 128:
            tm = max(128, (tm // 2 // 128) * 128)
        elif tb > 8:
            tb = max(8, (tb // 2 // 8) * 8)
        else:
            break
    return tb, tm


def neural_poisson_nmf_forward(L_weight, F, doc_indices, *, tb=None, tm=None):
    """
    Args:
      L_weight:    (n, k) float32 embedding table (model.L.weight).
      F:           (k, m) float32 un-normalized topic-term matrix (model.F).
      doc_indices: (B,)   int32 document indices.
    Returns:
      (B, m) float32 reconstructed document-term matrix.
    """
    B = int(doc_indices.shape[0])
    k, m = int(F.shape[0]), int(F.shape[1])

    # Plain-JAX prologue (hoisted out of the grid per perf review): embedding
    # gather (a contiguous (B,k) slab is already the right layout) and both
    # softmaxes — each computed exactly once, never per grid step.
    L_batch = jnp.take(L_weight.astype(jnp.float32), doc_indices, axis=0)  # (B, k)
    L_norm = jax.nn.softmax(L_batch, axis=1)                               # (B, k)
    F_norm = jax.nn.softmax(F.astype(jnp.float32), axis=1)                 # (k, m)

    # Size tiles from the double-buffer budget vs. this chip's physical VMEM,
    # and set the scoped-VMEM limit explicitly (defaults are far below physical).
    phys = _physical_vmem_bytes()
    vmem_limit = int(phys * 3 // 4)          # ~48 MiB on v7x, ~96 MiB on v5e/v6e
    budget = vmem_limit - (4 << 20)          # headroom for compiler scratch
    if tb is None or tm is None:
        tb_auto, tm_auto = _pick_tiles(B, m, k, budget)
        tb = tb or tb_auto
        tm = tm or tm_auto

    # Pad to tile multiples so every block is full (unmasked lane-dense stores).
    Bp = _round_up(B, tb)
    Mp = _round_up(m, tm)
    if Bp != B:
        L_norm = jnp.pad(L_norm, ((0, Bp - B), (0, 0)))
    if Mp != m:
        F_norm = jnp.pad(F_norm, ((0, 0), (0, Mp - m)))

    grid = (Mp // tm, Bp // tb)  # batch innermost -> F tile stays VMEM-resident
    out = pl.pallas_call(
        _nmf_matmul_kernel,
        out_shape=jax.ShapeDtypeStruct((Bp, Mp), jnp.float32),
        grid_spec=pltpu.PrefetchScalarGridSpec(
            num_scalar_prefetch=0,
            grid=grid,
            in_specs=[
                # (tb, k) block of normalized embeddings; changes every inner step.
                pl.BlockSpec((tb, k), lambda j, i: (i, 0)),
                # (k, tm) normalized F tile; invariant over the inner batch axis,
                # so Pallas skips the refetch -> one HBM pass over F total.
                pl.BlockSpec((k, tm), lambda j, i: (0, j)),
            ],
            out_specs=pl.BlockSpec((tb, tm), lambda j, i: (i, j)),
        ),
        compiler_params=pltpu.CompilerParams(
            dimension_semantics=("parallel", "parallel"),
            vmem_limit_bytes=vmem_limit,
        ),
        cost_estimate=pl.CostEstimate(
            flops=2 * B * k * m,
            transcendentals=0,
            bytes_accessed=4 * (B * k + k * m + B * m),
        ),
    )(L_norm, F_norm)

    if Bp != B or Mp != m:
        out = out[:B, :m]
    return out


def reference_forward(L_weight, F, doc_indices):
    L_batch = jnp.take(L_weight, doc_indices, axis=0)
    L_norm = jax.nn.softmax(L_batch, axis=1)
    F_norm = jax.nn.softmax(F, axis=1)
    return L_norm @ F_norm


if __name__ == "__main__":
    # Model dimensions (small, consistent with the module's __init__):
    n = 64     # number of documents
    m = 256    # vocabulary size
    k = 16     # number of topics
    B = 32     # batch size (number of doc indices)

    key = jax.random.PRNGKey(0)
    k_L, k_F, k_idx = jax.random.split(key, 3)

    # Deterministic parameter init matching nn.init.uniform_(a=0.0, b=0.1)
    L_weight = jax.random.uniform(k_L, (n, k), dtype=jnp.float32, minval=0.0, maxval=0.1)
    F = jax.random.uniform(k_F, (k, m), dtype=jnp.float32, minval=0.0, maxval=0.1)
    doc_indices = jax.random.randint(k_idx, (B,), 0, n, dtype=jnp.int32)

    # 1) Default path (single-block fast path at this size).
    out = jax.block_until_ready(neural_poisson_nmf_forward(L_weight, F, doc_indices))
    ref = jax.block_until_ready(reference_forward(L_weight, F, doc_indices))
    assert out.shape == (B, m)
    assert jnp.allclose(out, ref, atol=1e-5, rtol=1e-5), "mismatch vs reference (fast path)"

    # 2) Forced multi-tile grid (exercises F-resident grid order & index maps).
    out_tiled = jax.block_until_ready(
        neural_poisson_nmf_forward(L_weight, F, doc_indices, tb=8, tm=128))
    assert jnp.allclose(out_tiled, ref, atol=1e-5, rtol=1e-5), "mismatch vs reference (tiled)"

    # 3) Non-aligned B/m (exercises the pad-to-8/128 + slice path).
    B2, m2 = 30, 200
    F2 = F[:, :m2]
    idx2 = doc_indices[:B2]
    out2 = jax.block_until_ready(neural_poisson_nmf_forward(L_weight, F2, idx2))
    ref2 = jax.block_until_ready(reference_forward(L_weight, F2, idx2))
    assert out2.shape == (B2, m2)
    assert jnp.allclose(out2, ref2, atol=1e-5, rtol=1e-5), "mismatch vs reference (padded)"

    print("KERNEL_OK")
</pallas_src>

<mosaic_0001>
module attributes {stable_mosaic.version = 11 : i64} {
  func.func @_nmf_matmul_kernel(%arg0: i32, %arg1: i32, %arg2: memref<32x16xf32, #tpu.memory_space<vmem>>, %arg3: memref<16x256xf32, #tpu.memory_space<vmem>>, %arg4: memref<32x256xf32, #tpu.memory_space<vmem>>) attributes {dimension_semantics = [#tpu.dimension_semantics<parallel>, #tpu.dimension_semantics<parallel>], iteration_bounds = array<i64: 1, 1>, scalar_prefetch = 0 : i64, scratch_operands = 0 : i64, tpu.core_type = #tpu.core_type<tc>, window_params = [{transform_indices = @transform_0, window_bounds = array<i64: 32, 16>}, {transform_indices = @transform_1, window_bounds = array<i64: 16, 256>}, {transform_indices = @transform_2, window_bounds = array<i64: 32, 256>}]} {
    %c0 = arith.constant 0 : index
    %c0_0 = arith.constant 0 : index
    %0 = vector.load %arg2[%c0, %c0_0] : memref<32x16xf32, #tpu.memory_space<vmem>>, vector<32x16xf32>
    %c0_1 = arith.constant 0 : index
    %c0_2 = arith.constant 0 : index
    %1 = vector.load %arg3[%c0_1, %c0_2] : memref<16x256xf32, #tpu.memory_space<vmem>>, vector<16x256xf32>
    %cst = arith.constant dense<0.000000e+00> : vector<32x256xf32>
    %2 = tpu.matmul %0, %1, %cst {dimension_numbers = #tpu.dot_dimension_numbers<[1], [0], [0], [1], [0, 0, 1, 1], [], []>} : vector<32x16xf32>, vector<16x256xf32>, vector<32x256xf32> -> vector<32x256xf32>
    %c0_3 = arith.constant 0 : index
    %c0_4 = arith.constant 0 : index
    %3 = vector.load %arg4[%c0_3, %c0_4] : memref<32x256xf32, #tpu.memory_space<vmem>>, vector<32x256xf32>
    tpu.vector_store %arg4[%c0_3, %c0_4], %2 {strides = array<i32>} : memref<32x256xf32, #tpu.memory_space<vmem>>, vector<32x256xf32>,
    return
  }
  func.func @transform_0(%arg0: i32, %arg1: i32) -> (i32, i32) {
    %c0_i32 = arith.constant 0 : i32
    %c0_i32_0 = arith.constant 0 : i32
    return %arg1, %c0_i32 : i32, i32
  }
  func.func @transform_1(%arg0: i32, %arg1: i32) -> (i32, i32) {
    %c0_i32 = arith.constant 0 : i32
    %c0_i32_0 = arith.constant 0 : i32
    return %c0_i32, %arg0 : i32, i32
  }
  func.func @transform_2(%arg0: i32, %arg1: i32) -> (i32, i32) {
    %c0_i32 = arith.constant 0 : i32
    return %arg1, %arg0 : i32, i32
  }
}

</mosaic_0001>

<llo_original>
// kernel: tpu_custom_call.1
$region0: #{tpu_custom_call.1}
  #allocation0 [shape = 'u32[]', space=smem, size = 0x4, offset = 0x4, fixed_abs, tag = 'smem constant byte address 0x4 - core index']
  #allocation1 [shape = 'u32[72,128]{1,0:T(1,128)}', space=vmem, size = 0x9000, scoped, tag = 'internal scratch']
  %s0 = inlined_call_operand.vmem [shape: f32[32,16], index: 0, kind: input, shape index: {}]
  %s1 = inlined_call_operand.vmem [shape: f32[16,256], index: 1, kind: input, shape index: {}]
  %s2 = inlined_call_operand.hbm [shape: f32[32,256], index: 2, kind: output, shape index: {}]
  %s3 = sld [smem:[#allocation0]]
  $region18: #{tpu_custom_call.1} parent=0
    _
  %s5 = ssub.s32 1, %s3
  %s6 = scalar_select 0, %s5, %s3
  $region1: #{tpu_custom_call.1} parent=0
    #allocation2 [shape = 'u8[32768]{0}', space=vmem, size = 0x8000, scoped, tag = 'output window, operand 0, single buffered']
    #allocation3 [shape = 's32[1]{0}', space=sflag, size = 0x4, scoped, tag = 'scoped memory for tpu_custom_call.1']
    %7 = vsyncpa [#allocation3], 0
    // Predicated region
    $region2: #{tpu_custom_call.1} parent=1 // pred_check
      _
    $region3: #{tpu_custom_call.1} parent=1 // pred_check_branch
      %9 = sbr.rel (0) target = $region5
    $region4: #{tpu_custom_call.1} parent=1 // pred_region
      _
    $region5: #{tpu_custom_call.1} parent=1 // pred_fallthru
      _
    // Predicated region
    $region6: #{tpu_custom_call.1} parent=1 // pred_check
      _
    $region7: #{tpu_custom_call.1} parent=1 // pred_check_branch
      %11 = sbr.rel (0) target = $region9
    $region8: #{tpu_custom_call.1} parent=1 // pred_region
      _
    $region9: #{tpu_custom_call.1} parent=1 // pred_fallthru
      _
    %v12 = vld [vmem:[%s0] sm:$0xff]
    %v13 = vld [vmem:[%s0 + $0x8] sm:$0xff]
    %v14 = vld [vmem:[%s0 + $0x10] sm:$0xff]
    %v15 = vld [vmem:[%s0 + $0x18] sm:$0xff]
    %v16 = vld [vmem:[%s1] sm:$0xff]
    %v17 = vld [vmem:[%s1 + $0x8] sm:$0xff]
    %v18 = vld [vmem:[%s1 + $0x10] sm:$0xff]
    %v19 = vld [vmem:[%s1 + $0x18] sm:$0xff]
    %vm20 = vcmask 130048
    %v22 = vsel %vm20, %v12, 0
    %v25 = vsel %vm20, %v13, 0
    %v28 = vsel %vm20, %v14, 0
    %v31 = vsel %vm20, %v15, 0
    %33 = vmatpush.msra.mxu0 0.0
    %34 = vmatpush.msra.mxu0 0.0
    %35 = vmatpush.msra.mxu0 0.0
    %36 = vmatpush.msra.mxu0 0.0
    %37 = vmatpush.msra.mxu0 0.0
    %38 = vmatpush.msra.mxu0 0.0
    %39 = vmatpush.msra.mxu0 0.0
    %40 = vmatpush.msra.mxu0 0.0
    %41 = vmatpush.msra.mxu0 0.0
    %42 = vmatpush.msra.mxu0 0.0
    %43 = vmatpush.msra.mxu0 0.0
    %44 = vmatpush.msra.mxu0 0.0
    %45 = vmatpush.msra.mxu0 0.0
    %46 = vmatpush.msra.mxu0 0.0
    %47 = vmatpush.msra.mxu0 %v18
    %48 = vmatpush.msra.mxu0 %v16
    %49 = vmatmul.f32.gmra.mxu0 %v22
    %v50 = vpop.f32.mrf.mxu0
    %v51 = vadd.f32 0.0, %v50
    %52 = vmatmul.f32.gmra.mxu0 %v25
    %v53 = vpop.f32.mrf.mxu0
    %v54 = vadd.f32 0.0, %v53
    %55 = vmatmul.f32.gmra.mxu0 %v28
    %v56 = vpop.f32.mrf.mxu0
    %v57 = vadd.f32 0.0, %v56
    %58 = vmatmul.f32.gmra.mxu0 %v31
    %v59 = vpop.f32.mrf.mxu0
    %v60 = vadd.f32 0.0, %v59
    %61 = vdwg.mxu0
    %62 = vmatpush.msra.mxu0 0.0
    %63 = vmatpush.msra.mxu0 0.0
    %64 = vmatpush.msra.mxu0 0.0
    %65 = vmatpush.msra.mxu0 0.0
    %66 = vmatpush.msra.mxu0 0.0
    %67 = vmatpush.msra.mxu0 0.0
    %68 = vmatpush.msra.mxu0 0.0
    %69 = vmatpush.msra.mxu0 0.0
    %70 = vmatpush.msra.mxu0 0.0
    %71 = vmatpush.msra.mxu0 0.0
    %72 = vmatpush.msra.mxu0 0.0
    %73 = vmatpush.msra.mxu0 0.0
    %74 = vmatpush.msra.mxu0 0.0
    %75 = vmatpush.msra.mxu0 0.0
    %76 = vmatpush.msra.mxu0 %v19
    %77 = vmatpush.msra.mxu0 %v17
    %78 = vmatmul.f32.gmra.mxu0 %v22
    %v79 = vpop.f32.mrf.mxu0
    %v80 = vadd.f32 0.0, %v79
    %81 = vmatmul.f32.gmra.mxu0 %v25
    %v82 = vpop.f32.mrf.mxu0
    %v83 = vadd.f32 0.0, %v82
    %84 = vmatmul.f32.gmra.mxu0 %v28
    %v85 = vpop.f32.mrf.mxu0
    %v86 = vadd.f32 0.0, %v85
    %87 = vmatmul.f32.gmra.mxu0 %v31
    %v88 = vpop.f32.mrf.mxu0
    %v89 = vadd.f32 0.0, %v88
    %90 = vdwg.mxu0
    %91 = vst [vmem:[#allocation2] sm:$0xff] %v51
    %92 = vst [vmem:[#allocation2 + $0x8] sm:$0xff] %v80
    %93 = vst [vmem:[#allocation2 + $0x10] sm:$0xff] %v54
    %94 = vst [vmem:[#allocation2 + $0x18] sm:$0xff] %v83
    %95 = vst [vmem:[#allocation2 + $0x20] sm:$0xff] %v57
    %96 = vst [vmem:[#allocation2 + $0x28] sm:$0xff] %v86
    %97 = vst [vmem:[#allocation2 + $0x30] sm:$0xff] %v60
    %98 = vst [vmem:[#allocation2 + $0x38] sm:$0xff] %v89
    // Predicated region
    $region10: #{tpu_custom_call.1} parent=1 // pred_check
      _
    $region11: #{tpu_custom_call.1} parent=1 // pred_check_branch
      %100 = sbr.rel (0) target = $region13
    $region12: #{tpu_custom_call.1} parent=1 // pred_region
      %102 = vsyncadd [#allocation3], 0
      %s103 = sshll.u32 [#allocation2], 4
      %s104 = int_to_ptr.vmem [resolvable:$true] %s103
      %s105 = sshll.u32 %s2, 4
      %s106 = int_to_ptr.hbm [resolvable:$true] %s105
      %111 = dma.vmem_to_hbm [thread:$0]  %s104, 1024, %s106, [#allocation3], 256, 256, 16
    $region13: #{tpu_custom_call.1} parent=1 // pred_fallthru
      _
    // Predicated region
    $region14: #{tpu_custom_call.1} parent=1 // pred_check
      _
    $region15: #{tpu_custom_call.1} parent=1 // pred_check_branch
      %113 = sbr.rel (0) target = $region17
    $region16: #{tpu_custom_call.1} parent=1 // pred_region
      %115 = dma.done [#allocation3], 1024
    $region17: #{tpu_custom_call.1} parent=1 // pred_fallthru
      _
    %116 = vsyncpa [#allocation3], 1

</llo_original>
